<compile_context>
chip_gen: v7x
topology: tpu7x:2x2x1
jax: 0.10.0
libtpu: 0.0.40
codegen_flags: <defaults>
</compile_context>

<pallas_src>
import math
import functools

import jax
import jax.numpy as jnp
from jax import lax
from jax.experimental import pallas as pl
from jax.experimental.pallas import tpu as pltpu
import numpy as np


# ------------------------------ helpers --------------------------------------

def _layernorm_f32(h, w, b, eps=1e-5):
    """LayerNorm with stats in f32. h: (rows, C) f32, w/b: (C,) f32."""
    mu = jnp.mean(h, axis=-1, keepdims=True)
    var = jnp.mean((h - mu) ** 2, axis=-1, keepdims=True)
    return (h - mu) * lax.rsqrt(var + eps) * w + b


def _vmem_limit_bytes(frac=0.75, fallback=48 * 1024 * 1024):
    try:
        return int(pltpu.get_tpu_info().vmem_capacity_bytes * frac)
    except Exception:
        return fallback


def _default_tile():
    """256 tiles fill the 256x256 MXU on v6e/v7x; v5e/v4 MXU is 128-wide, so 128."""
    try:
        kind = jax.devices()[0].device_kind.lower()
    except Exception:
        return 128
    if any(g in kind for g in ("v2", "v3", "v4", "v5")):
        return 128
    return 256


# ----------------------- kernel 1: ln_1 + K/V projection ----------------------

def kv_kernel(x_ref, ln1w_ref, ln1b_ref, wkv_ref, bkv_ref,
              k_ref, v_ref, kh_ref, vh_ref):
    C = x_ref.shape[-1]
    H = kh_ref.shape[1]
    hd = kh_ref.shape[-1]
    x = x_ref[0].astype(jnp.float32)                         # (tq, C)
    h = _layernorm_f32(x, ln1w_ref[0], ln1b_ref[0]).astype(wkv_ref.dtype)
    kv = jnp.dot(h, wkv_ref[...], preferred_element_type=jnp.float32) + bkv_ref[0]
    k = kv[:, :C].astype(k_ref.dtype)
    v = kv[:, C:].astype(v_ref.dtype)
    k_ref[0] = k                                             # (B,T,C) kv_cache layout
    v_ref[0] = v
    # head-split copies for the attention kernel: per-head lane slices written once
    # here instead of a separate XLA transpose pass over HBM.
    for hh in range(H):
        kh_ref[0, hh] = k[:, hh * hd:(hh + 1) * hd]
        vh_ref[0, hh] = v[:, hh * hd:(hh + 1) * hd]


# ---- kernel 2: Q proj + flash attention + c_proj + residual + ln_2 + MLP -----

def attn_mlp_kernel(n_head, approx_recip,
                    x_ref, kh_ref, vh_ref,
                    ln1w_ref, ln1b_ref, wq_ref, bq_ref,
                    waproj_ref, baproj_ref, ln2w_ref, ln2b_ref,
                    wfc_ref, bfc_ref, wmproj_ref, bmproj_ref,
                    y_ref,
                    q_scr, ctx_scr, m_scr, l_scr, acc_scr):
    qi = pl.program_id(1)
    ki = pl.program_id(2)
    nk = pl.num_programs(2)
    H = n_head
    tq = x_ref.shape[1]
    C = x_ref.shape[2]
    hd = C // H
    tk = kh_ref.shape[2]
    scale = 1.0 / math.sqrt(hd)
    cdt = q_scr.dtype

    @pl.when(ki == 0)
    def _init():
        m_scr[...] = jnp.full_like(m_scr, -jnp.inf)
        l_scr[...] = jnp.zeros_like(l_scr)
        acc_scr[...] = jnp.zeros_like(acc_scr)
        # ln_1 + Q projection for this q-tile: Q never round-trips through HBM.
        xf = x_ref[0].astype(jnp.float32)
        hq = _layernorm_f32(xf, ln1w_ref[0], ln1b_ref[0]).astype(wq_ref.dtype)
        q2 = (jnp.dot(hq, wq_ref[...], preferred_element_type=jnp.float32)
              + bq_ref[0]).astype(cdt)                        # (tq, C)
        for hh in range(H):                                   # head-split into scratch
            q_scr[hh] = q2[:, hh * hd:(hh + 1) * hd]

    def _scores():
        # batched over heads, contraction on trailing dims -> no explicit k transpose
        return jnp.einsum("hqd,hkd->hqk", q_scr[...], kh_ref[0],
                          preferred_element_type=jnp.float32) * scale

    def _online_softmax_update(s):
        m_prev = m_scr[...]
        m_new = jnp.maximum(m_prev, jnp.max(s, axis=-1, keepdims=True))
        alpha = jnp.exp(m_prev - m_new)
        p = jnp.exp(s - m_new)
        l_scr[...] = alpha * l_scr[...] + jnp.sum(p, axis=-1, keepdims=True)
        acc_scr[...] = alpha * acc_scr[...] + jnp.einsum(
            "hqk,hkd->hqd", p.astype(vh_ref.dtype), vh_ref[0],
            preferred_element_type=jnp.float32)
        m_scr[...] = m_new

    # strictly-below-diagonal k-tile: fully visible, no mask work at all
    @pl.when(ki < qi)
    def _off_diag():
        _online_softmax_update(_scores())

    # diagonal k-tile: only place the causal mask is computed/applied
    @pl.when(ki == qi)
    def _diag():
        s = _scores()
        row = lax.broadcasted_iota(jnp.int32, (tq, tk), 0)
        col = lax.broadcasted_iota(jnp.int32, (tq, tk), 1)
        s = s + jnp.where(col <= row, 0.0, -1e30).astype(jnp.float32)[None, :, :]
        _online_softmax_update(s)

    # tiles with ki > qi do nothing (and, via the clamped index_map, DMA nothing).

    @pl.when(ki == nk - 1)
    def _finalize():
        # per-head normalize, relayout once to a lane-dense (tq, C) tile, then a single
        # full-depth c_proj matmul (no per-head K=hd dots).
        inv = pl.reciprocal(l_scr[...], approx=approx_recip)  # (H, tq, 1) f32
        ctx = acc_scr[...] * inv                              # (H, tq, hd) f32
        for hh in range(H):
            ctx_scr[:, hh * hd:(hh + 1) * hd] = ctx[hh].astype(cdt)
        attn = (jnp.dot(ctx_scr[...], waproj_ref[...],
                        preferred_element_type=jnp.float32) + baproj_ref[0])
        x2 = x_ref[0].astype(jnp.float32) + attn              # residual 1 (f32)
        hln = _layernorm_f32(x2, ln2w_ref[0], ln2b_ref[0]).astype(cdt)
        h1 = jnp.dot(hln, wfc_ref[...], preferred_element_type=jnp.float32) + bfc_ref[0]
        g = (0.5 * h1 * (1.0 + lax.erf(h1 * (1.0 / math.sqrt(2.0))))).astype(cdt)
        h2 = jnp.dot(g, wmproj_ref[...], preferred_element_type=jnp.float32) + bmproj_ref[0]
        y_ref[0] = (x2 + h2).astype(y_ref.dtype)              # residual 2


# ------------------------------ wrapper ---------------------------------------

def pallas_block(x, params, n_head, *, tq=None, compute_dtype=jnp.bfloat16):
    """x: (B, T, C). Returns (y, k_cache, v_cache); the caches are (B, T, C)
    pre-head-split (compute_dtype), matching the PyTorch module's kv_cache layout."""
    B, T, C = x.shape
    assert C % n_head == 0
    hd = C // n_head
    if tq is None:
        tq = _default_tile()
    tq = min(tq, T)
    assert T % tq == 0, "T must be a multiple of the q/k tile size"
    nt = T // tq

    f32 = jnp.float32
    xc = x.astype(compute_dtype)
    w_qkv = params["w_qkv"].astype(compute_dtype)
    w_q, w_kv = w_qkv[:, :C], w_qkv[:, C:]
    b_qkv = params["b_qkv"].astype(f32)
    b_q, b_kv = b_qkv[:, :C], b_qkv[:, C:]
    w_aproj = params["w_aproj"].astype(compute_dtype)
    w_fc = params["w_fc"].astype(compute_dtype)
    w_mproj = params["w_mproj"].astype(compute_dtype)
    ln1w, ln1b = params["ln1_w"].astype(f32), params["ln1_b"].astype(f32)
    ln2w, ln2b = params["ln2_w"].astype(f32), params["ln2_b"].astype(f32)
    b_aproj = params["b_aproj"].astype(f32)
    b_fc = params["b_fc"].astype(f32)
    b_mproj = params["b_mproj"].astype(f32)

    vmem_limit = _vmem_limit_bytes()

    # ---- kernel 1: ln_1 + K/V projection, tiled over (B, T) ----
    seq_spec = pl.BlockSpec((1, tq, C), lambda b, t: (b, t, 0))
    head_spec = pl.BlockSpec((1, n_head, tq, hd), lambda b, t: (b, 0, t, 0))
    const1 = lambda shape: pl.BlockSpec(shape, lambda b, t: (0, 0))

    k_cache, v_cache, kh, vh = pl.pallas_call(
        kv_kernel,
        out_shape=(jax.ShapeDtypeStruct((B, T, C), compute_dtype),
                   jax.ShapeDtypeStruct((B, T, C), compute_dtype),
                   jax.ShapeDtypeStruct((B, n_head, T, hd), compute_dtype),
                   jax.ShapeDtypeStruct((B, n_head, T, hd), compute_dtype)),
        grid_spec=pltpu.PrefetchScalarGridSpec(
            num_scalar_prefetch=0,
            grid=(B, nt),
            in_specs=[seq_spec, const1((1, C)), const1((1, C)),
                      const1((C, 2 * C)), const1((1, 2 * C))],
            out_specs=[seq_spec, seq_spec, head_spec, head_spec],
        ),
        compiler_params=pltpu.CompilerParams(
            dimension_semantics=("parallel", "parallel"),
            vmem_limit_bytes=vmem_limit),
    )(xc, ln1w, ln1b, w_kv, b_kv)

    # ---- kernel 2: Q + flash attention + c_proj + residual + ln_2 + MLP + residual ----
    x_spec = pl.BlockSpec((1, tq, C), lambda b, qi, ki: (b, qi, 0))
    # clamp: for ki > qi (fully masked; compute gated off by pl.when) keep the diagonal
    # block index so Pallas skips the K/V re-DMA entirely.
    kvh_spec = pl.BlockSpec((1, n_head, tq, hd),
                            lambda b, qi, ki: (b, 0, jnp.minimum(ki, qi), 0))
    const2 = lambda shape: pl.BlockSpec(shape, lambda b, qi, ki: (0, 0))

    kernel = functools.partial(
        attn_mlp_kernel, n_head,
        jnp.dtype(compute_dtype) == jnp.dtype(jnp.bfloat16))  # approx recip in bf16 only

    y = pl.pallas_call(
        kernel,
        out_shape=jax.ShapeDtypeStruct((B, T, C), compute_dtype),
        grid_spec=pltpu.PrefetchScalarGridSpec(
            num_scalar_prefetch=0,
            grid=(B, nt, nt),
            in_specs=[x_spec, kvh_spec, kvh_spec,
                      const2((1, C)), const2((1, C)),
                      const2((C, C)), const2((1, C)),          # w_q, b_q
                      const2((C, C)), const2((1, C)),          # w_aproj, b_aproj
                      const2((1, C)), const2((1, C)),          # ln2
                      const2((C, 4 * C)), const2((1, 4 * C)),  # w_fc, b_fc
                      const2((4 * C, C)), const2((1, C))],     # w_mproj, b_mproj
            out_specs=x_spec,
            scratch_shapes=[pltpu.VMEM((n_head, tq, hd), compute_dtype),  # q (head-split)
                            pltpu.VMEM((tq, C), compute_dtype),           # ctx for c_proj
                            pltpu.VMEM((n_head, tq, 1), jnp.float32),     # m
                            pltpu.VMEM((n_head, tq, 1), jnp.float32),     # l
                            pltpu.VMEM((n_head, tq, hd), jnp.float32)],   # acc
        ),
        compiler_params=pltpu.CompilerParams(
            dimension_semantics=("parallel", "parallel", "arbitrary"),
            vmem_limit_bytes=vmem_limit),
    )(xc, kh, vh,
      ln1w, ln1b, w_q, b_q,
      w_aproj, b_aproj, ln2w, ln2b, w_fc, b_fc, w_mproj, b_mproj)

    return y, k_cache, v_cache


# --------------------------- pure-JAX reference --------------------------------

def reference_block(x, params, n_head):
    B, T, C = x.shape
    hd = C // n_head

    def ln(h, w, b):
        mu = jnp.mean(h, axis=-1, keepdims=True)
        var = jnp.mean((h - mu) ** 2, axis=-1, keepdims=True)
        return (h - mu) / jnp.sqrt(var + 1e-5) * w[0] + b[0]

    h1 = ln(x, params["ln1_w"], params["ln1_b"])
    qkv = h1 @ params["w_qkv"] + params["b_qkv"][0]
    q, k, v = qkv[..., :C], qkv[..., C:2 * C], qkv[..., 2 * C:]
    qh = q.reshape(B, T, n_head, hd).transpose(0, 2, 1, 3)
    kh = k.reshape(B, T, n_head, hd).transpose(0, 2, 1, 3)
    vh = v.reshape(B, T, n_head, hd).transpose(0, 2, 1, 3)
    att = jnp.einsum("bhqd,bhkd->bhqk", qh, kh) / math.sqrt(hd)
    mask = jnp.tril(jnp.ones((T, T), bool))
    att = jnp.where(mask, att, -jnp.inf)
    att = jax.nn.softmax(att, axis=-1)
    y = jnp.einsum("bhqk,bhkd->bhqd", att, vh).transpose(0, 2, 1, 3).reshape(B, T, C)
    y = y @ params["w_aproj"] + params["b_aproj"][0]
    x2 = x + y
    h2 = ln(x2, params["ln2_w"], params["ln2_b"])
    m = h2 @ params["w_fc"] + params["b_fc"][0]
    m = 0.5 * m * (1.0 + lax.erf(m / math.sqrt(2.0)))
    m = m @ params["w_mproj"] + params["b_mproj"][0]
    return x2 + m, k, v


# ----------------------------------- main --------------------------------------

if __name__ == "__main__":
    # Small config consistent with the module: n_embd=32, n_head=4, bias=True, dropout=0.0
    C, n_head = 32, 4

    key = jax.random.PRNGKey(0)
    ks = jax.random.split(key, 10)

    def init_w(k, shape, std=0.02):
        return jax.random.normal(k, shape, jnp.float32) * std

    params = {
        "ln1_w": jnp.ones((1, C), jnp.float32),
        "ln1_b": jnp.zeros((1, C), jnp.float32),
        "w_qkv": init_w(ks[0], (C, 3 * C)),      # c_attn weight, pre-transposed (in, out)
        "b_qkv": init_w(ks[1], (1, 3 * C)),
        "w_aproj": init_w(ks[2], (C, C)),
        "b_aproj": init_w(ks[3], (1, C)),
        "ln2_w": jnp.ones((1, C), jnp.float32),
        "ln2_b": jnp.zeros((1, C), jnp.float32),
        "w_fc": init_w(ks[4], (C, 4 * C)),
        "b_fc": init_w(ks[5], (1, 4 * C)),
        "w_mproj": init_w(ks[6], (4 * C, C)),
        "b_mproj": init_w(ks[7], (1, C)),
    }

    def check(B, T, tq, xkey):
        x = jax.random.normal(xkey, (B, T, C), jnp.float32)
        y_exp, k_exp, v_exp = reference_block(x, params, n_head)

        # strict correctness: f32 compute path
        y32, k32, v32 = pallas_block(x, params, n_head, tq=tq, compute_dtype=jnp.float32)
        jax.block_until_ready((y32, k32, v32))
        np.testing.assert_allclose(np.asarray(y32), np.asarray(y_exp), rtol=1e-4, atol=1e-4)
        np.testing.assert_allclose(np.asarray(k32), np.asarray(k_exp), rtol=1e-4, atol=1e-4)
        np.testing.assert_allclose(np.asarray(v32), np.asarray(v_exp), rtol=1e-4, atol=1e-4)

        # perf path: bf16 weights/activations, f32 accumulation/softmax/LN stats
        ybf, kbf, vbf = pallas_block(x, params, n_head, tq=tq, compute_dtype=jnp.bfloat16)
        jax.block_until_ready((ybf, kbf, vbf))
        np.testing.assert_allclose(np.asarray(ybf.astype(jnp.float32)), np.asarray(y_exp),
                                   rtol=5e-2, atol=5e-2)
        np.testing.assert_allclose(np.asarray(kbf.astype(jnp.float32)), np.asarray(k_exp),
                                   rtol=5e-2, atol=5e-2)
        np.testing.assert_allclose(np.asarray(vbf.astype(jnp.float32)), np.asarray(v_exp),
                                   rtol=5e-2, atol=5e-2)

    # 1) spec-consistent small shape (batch=2, seq=8): single-tile path
    check(2, 8, None, ks[8])
    # 2) multi-k-tile flash path (T=32, tq=8 -> nt=4): exercises the online softmax
    #    across k-tiles, the causal pl.when skip, the clamped K/V DMA index_map, and
    #    finalize after skipped upper-triangular grid steps.
    check(2, 32, 8, ks[9])

    print("KERNEL_OK")
</pallas_src>

<mosaic_0001>
module attributes {stable_mosaic.version = 11 : i64} {
  func.func @kv_kernel(%arg0: i32, %arg1: i32, %arg2: memref<1x8x32xf32, #tpu.memory_space<vmem>>, %arg3: memref<1x32xf32, #tpu.memory_space<vmem>>, %arg4: memref<1x32xf32, #tpu.memory_space<vmem>>, %arg5: memref<32x64xf32, #tpu.memory_space<vmem>>, %arg6: memref<1x64xf32, #tpu.memory_space<vmem>>, %arg7: memref<1x8x32xf32, #tpu.memory_space<vmem>>, %arg8: memref<1x8x32xf32, #tpu.memory_space<vmem>>, %arg9: memref<1x4x8x8xf32, #tpu.memory_space<vmem>>, %arg10: memref<1x4x8x8xf32, #tpu.memory_space<vmem>>) attributes {dimension_semantics = [#tpu.dimension_semantics<parallel>, #tpu.dimension_semantics<parallel>], iteration_bounds = array<i64: 2, 1>, scalar_prefetch = 0 : i64, scratch_operands = 0 : i64, tpu.core_type = #tpu.core_type<tc>, window_params = [{transform_indices = @transform_0, window_bounds = array<i64: 1, 8, 32>}, {pipeline_mode = #tpu.pipeline_mode<synchronous>, transform_indices = @transform_1, window_bounds = array<i64: 1, 32>}, {pipeline_mode = #tpu.pipeline_mode<synchronous>, transform_indices = @transform_2, window_bounds = array<i64: 1, 32>}, {pipeline_mode = #tpu.pipeline_mode<synchronous>, transform_indices = @transform_3, window_bounds = array<i64: 32, 64>}, {pipeline_mode = #tpu.pipeline_mode<synchronous>, transform_indices = @transform_4, window_bounds = array<i64: 1, 64>}, {transform_indices = @transform_5, window_bounds = array<i64: 1, 8, 32>}, {transform_indices = @transform_6, window_bounds = array<i64: 1, 8, 32>}, {transform_indices = @transform_7, window_bounds = array<i64: 1, 4, 8, 8>}, {transform_indices = @transform_8, window_bounds = array<i64: 1, 4, 8, 8>}]} {
    %c0 = arith.constant 0 : index
    %c0_0 = arith.constant 0 : index
    %c0_1 = arith.constant 0 : index
    %0 = vector.load %arg2[%c0, %c0_0, %c0_1] : memref<1x8x32xf32, #tpu.memory_space<vmem>>, vector<1x8x32xf32>
    %1 = vector.shape_cast %0 : vector<1x8x32xf32> to vector<8x32xf32>
    %c0_2 = arith.constant 0 : index
    %c0_3 = arith.constant 0 : index
    %2 = vector.load %arg3[%c0_2, %c0_3] : memref<1x32xf32, #tpu.memory_space<vmem>>, vector<1x32xf32>
    %3 = vector.shape_cast %2 : vector<1x32xf32> to vector<32xf32>
    %c0_4 = arith.constant 0 : index
    %c0_5 = arith.constant 0 : index
    %4 = vector.load %arg4[%c0_4, %c0_5] : memref<1x32xf32, #tpu.memory_space<vmem>>, vector<1x32xf32>
    %5 = vector.shape_cast %4 : vector<1x32xf32> to vector<32xf32>
    %cst = arith.constant dense<0.000000e+00> : vector<8xf32>
    %6 = vector.multi_reduction <add>, %1, %cst [1] : vector<8x32xf32> to vector<8xf32>
    %7 = vector.shape_cast %6 : vector<8xf32> to vector<8x1xf32>
    %cst_6 = arith.constant 3.200000e+01 : f32
    %8 = vector.broadcast %cst_6 : f32 to vector<8x1xf32>
    %9 = arith.divf %7, %8 : vector<8x1xf32>
    %10 = vector.broadcast %9 : vector<8x1xf32> to vector<8x32xf32>
    %11 = arith.subf %1, %10 : vector<8x32xf32>
    %12 = arith.mulf %11, %11 : vector<8x32xf32>
    %cst_7 = arith.constant dense<0.000000e+00> : vector<8xf32>
    %13 = vector.multi_reduction <add>, %12, %cst_7 [1] : vector<8x32xf32> to vector<8xf32>
    %14 = vector.shape_cast %13 : vector<8xf32> to vector<8x1xf32>
    %cst_8 = arith.constant 3.200000e+01 : f32
    %15 = vector.broadcast %cst_8 : f32 to vector<8x1xf32>
    %16 = arith.divf %14, %15 : vector<8x1xf32>
    %17 = vector.broadcast %9 : vector<8x1xf32> to vector<8x32xf32>
    %18 = arith.subf %1, %17 : vector<8x32xf32>
    %cst_9 = arith.constant 9.99999974E-6 : f32
    %19 = vector.broadcast %cst_9 : f32 to vector<8x1xf32>
    %20 = arith.addf %16, %19 : vector<8x1xf32>
    %21 = math.rsqrt %20 : vector<8x1xf32>
    %22 = vector.broadcast %21 : vector<8x1xf32> to vector<8x32xf32>
    %23 = arith.mulf %18, %22 : vector<8x32xf32>
    %24 = vector.shape_cast %3 : vector<32xf32> to vector<1x32xf32>
    %25 = vector.broadcast %24 : vector<1x32xf32> to vector<8x32xf32>
    %26 = arith.mulf %23, %25 : vector<8x32xf32>
    %27 = vector.shape_cast %5 : vector<32xf32> to vector<1x32xf32>
    %28 = vector.broadcast %27 : vector<1x32xf32> to vector<8x32xf32>
    %29 = arith.addf %26, %28 : vector<8x32xf32>
    %c0_10 = arith.constant 0 : index
    %c0_11 = arith.constant 0 : index
    %30 = vector.load %arg5[%c0_10, %c0_11] : memref<32x64xf32, #tpu.memory_space<vmem>>, vector<32x64xf32>
    %cst_12 = arith.constant dense<0.000000e+00> : vector<8x64xf32>
    %31 = tpu.matmul %29, %30, %cst_12 {dimension_numbers = #tpu.dot_dimension_numbers<[1], [0], [0], [1], [0, 0, 1, 1], [], []>} : vector<8x32xf32>, vector<32x64xf32>, vector<8x64xf32> -> vector<8x64xf32>
    %c0_13 = arith.constant 0 : index
    %c0_14 = arith.constant 0 : index
    %32 = vector.load %arg6[%c0_13, %c0_14] : memref<1x64xf32, #tpu.memory_space<vmem>>, vector<1x64xf32>
    %33 = vector.shape_cast %32 : vector<1x64xf32> to vector<64xf32>
    %34 = vector.shape_cast %33 : vector<64xf32> to vector<1x64xf32>
    %35 = vector.broadcast %34 : vector<1x64xf32> to vector<8x64xf32>
    %36 = arith.addf %31, %35 : vector<8x64xf32>
    %37 = vector.extract_strided_slice %36 {offsets = [0, 0], sizes = [8, 32], strides = [1, 1]} : vector<8x64xf32> to vector<8x32xf32>
    %38 = vector.extract_strided_slice %36 {offsets = [0, 32], sizes = [8, 32], strides = [1, 1]} : vector<8x64xf32> to vector<8x32xf32>
    %c0_15 = arith.constant 0 : index
    %c0_16 = arith.constant 0 : index
    %c0_17 = arith.constant 0 : index
    %39 = vector.load %arg7[%c0_15, %c0_16, %c0_17] : memref<1x8x32xf32, #tpu.memory_space<vmem>>, vector<1x8x32xf32>
    %40 = vector.shape_cast %39 : vector<1x8x32xf32> to vector<8x32xf32>
    %41 = vector.shape_cast %37 : vector<8x32xf32> to vector<1x8x32xf32>
    tpu.vector_store %arg7[%c0_15, %c0_16, %c0_17], %41 {strides = array<i32>} : memref<1x8x32xf32, #tpu.memory_space<vmem>>, vector<1x8x32xf32>,
    %c0_18 = arith.constant 0 : index
    %c0_19 = arith.constant 0 : index
    %c0_20 = arith.constant 0 : index
    %42 = vector.load %arg8[%c0_18, %c0_19, %c0_20] : memref<1x8x32xf32, #tpu.memory_space<vmem>>, vector<1x8x32xf32>
    %43 = vector.shape_cast %42 : vector<1x8x32xf32> to vector<8x32xf32>
    %44 = vector.shape_cast %38 : vector<8x32xf32> to vector<1x8x32xf32>
    tpu.vector_store %arg8[%c0_18, %c0_19, %c0_20], %44 {strides = array<i32>} : memref<1x8x32xf32, #tpu.memory_space<vmem>>, vector<1x8x32xf32>,
    %45 = vector.extract_strided_slice %37 {offsets = [0, 0], sizes = [8, 8], strides = [1, 1]} : vector<8x32xf32> to vector<8x8xf32>
    %c0_21 = arith.constant 0 : index
    %c0_22 = arith.constant 0 : index
    %c0_23 = arith.constant 0 : index
    %c0_24 = arith.constant 0 : index
    %46 = vector.load %arg9[%c0_21, %c0_22, %c0_23, %c0_24] : memref<1x4x8x8xf32, #tpu.memory_space<vmem>>, vector<1x1x8x8xf32>
    %47 = vector.shape_cast %46 : vector<1x1x8x8xf32> to vector<8x8xf32>
    %48 = vector.shape_cast %45 : vector<8x8xf32> to vector<1x1x8x8xf32>
    tpu.vector_store %arg9[%c0_21, %c0_22, %c0_23, %c0_24], %48 {strides = array<i32>} : memref<1x4x8x8xf32, #tpu.memory_space<vmem>>, vector<1x1x8x8xf32>,
    %49 = vector.extract_strided_slice %38 {offsets = [0, 0], sizes = [8, 8], strides = [1, 1]} : vector<8x32xf32> to vector<8x8xf32>
    %c0_25 = arith.constant 0 : index
    %c0_26 = arith.constant 0 : index
    %c0_27 = arith.constant 0 : index
    %c0_28 = arith.constant 0 : index
    %50 = vector.load %arg10[%c0_25, %c0_26, %c0_27, %c0_28] : memref<1x4x8x8xf32, #tpu.memory_space<vmem>>, vector<1x1x8x8xf32>
    %51 = vector.shape_cast %50 : vector<1x1x8x8xf32> to vector<8x8xf32>
    %52 = vector.shape_cast %49 : vector<8x8xf32> to vector<1x1x8x8xf32>
    tpu.vector_store %arg10[%c0_25, %c0_26, %c0_27, %c0_28], %52 {strides = array<i32>} : memref<1x4x8x8xf32, #tpu.memory_space<vmem>>, vector<1x1x8x8xf32>,
    %53 = vector.extract_strided_slice %37 {offsets = [0, 8], sizes = [8, 8], strides = [1, 1]} : vector<8x32xf32> to vector<8x8xf32>
    %c0_29 = arith.constant 0 : index
    %c1 = arith.constant 1 : index
    %c0_30 = arith.constant 0 : index
    %c0_31 = arith.constant 0 : index
    %54 = vector.load %arg9[%c0_29, %c1, %c0_30, %c0_31] : memref<1x4x8x8xf32, #tpu.memory_space<vmem>>, vector<1x1x8x8xf32>
    %55 = vector.shape_cast %54 : vector<1x1x8x8xf32> to vector<8x8xf32>
    %56 = vector.shape_cast %53 : vector<8x8xf32> to vector<1x1x8x8xf32>
    tpu.vector_store %arg9[%c0_29, %c1, %c0_30, %c0_31], %56 {strides = array<i32>} : memref<1x4x8x8xf32, #tpu.memory_space<vmem>>, vector<1x1x8x8xf32>,
    %57 = vector.extract_strided_slice %38 {offsets = [0, 8], sizes = [8, 8], strides = [1, 1]} : vector<8x32xf32> to vector<8x8xf32>
    %c0_32 = arith.constant 0 : index
    %c1_33 = arith.constant 1 : index
    %c0_34 = arith.constant 0 : index
    %c0_35 = arith.constant 0 : index
    %58 = vector.load %arg10[%c0_32, %c1_33, %c0_34, %c0_35] : memref<1x4x8x8xf32, #tpu.memory_space<vmem>>, vector<1x1x8x8xf32>
    %59 = vector.shape_cast %58 : vector<1x1x8x8xf32> to vector<8x8xf32>
    %60 = vector.shape_cast %57 : vector<8x8xf32> to vector<1x1x8x8xf32>
    tpu.vector_store %arg10[%c0_32, %c1_33, %c0_34, %c0_35], %60 {strides = array<i32>} : memref<1x4x8x8xf32, #tpu.memory_space<vmem>>, vector<1x1x8x8xf32>,
    %61 = vector.extract_strided_slice %37 {offsets = [0, 16], sizes = [8, 8], strides = [1, 1]} : vector<8x32xf32> to vector<8x8xf32>
    %c0_36 = arith.constant 0 : index
    %c2 = arith.constant 2 : index
    %c0_37 = arith.constant 0 : index
    %c0_38 = arith.constant 0 : index
    %62 = vector.load %arg9[%c0_36, %c2, %c0_37, %c0_38] : memref<1x4x8x8xf32, #tpu.memory_space<vmem>>, vector<1x1x8x8xf32>
    %63 = vector.shape_cast %62 : vector<1x1x8x8xf32> to vector<8x8xf32>
    %64 = vector.shape_cast %61 : vector<8x8xf32> to vector<1x1x8x8xf32>
    tpu.vector_store %arg9[%c0_36, %c2, %c0_37, %c0_38], %64 {strides = array<i32>} : memref<1x4x8x8xf32, #tpu.memory_space<vmem>>, vector<1x1x8x8xf32>,
    %65 = vector.extract_strided_slice %38 {offsets = [0, 16], sizes = [8, 8], strides = [1, 1]} : vector<8x32xf32> to vector<8x8xf32>
    %c0_39 = arith.constant 0 : index
    %c2_40 = arith.constant 2 : index
    %c0_41 = arith.constant 0 : index
    %c0_42 = arith.constant 0 : index
    %66 = vector.load %arg10[%c0_39, %c2_40, %c0_41, %c0_42] : memref<1x4x8x8xf32, #tpu.memory_space<vmem>>, vector<1x1x8x8xf32>
    %67 = vector.shape_cast %66 : vector<1x1x8x8xf32> to vector<8x8xf32>
    %68 = vector.shape_cast %65 : vector<8x8xf32> to vector<1x1x8x8xf32>
    tpu.vector_store %arg10[%c0_39, %c2_40, %c0_41, %c0_42], %68 {strides = array<i32>} : memref<1x4x8x8xf32, #tpu.memory_space<vmem>>, vector<1x1x8x8xf32>,
    %69 = vector.extract_strided_slice %37 {offsets = [0, 24], sizes = [8, 8], strides = [1, 1]} : vector<8x32xf32> to vector<8x8xf32>
    %c0_43 = arith.constant 0 : index
    %c3 = arith.constant 3 : index
    %c0_44 = arith.constant 0 : index
    %c0_45 = arith.constant 0 : index
    %70 = vector.load %arg9[%c0_43, %c3, %c0_44, %c0_45] : memref<1x4x8x8xf32, #tpu.memory_space<vmem>>, vector<1x1x8x8xf32>
    %71 = vector.shape_cast %70 : vector<1x1x8x8xf32> to vector<8x8xf32>
    %72 = vector.shape_cast %69 : vector<8x8xf32> to vector<1x1x8x8xf32>
    tpu.vector_store %arg9[%c0_43, %c3, %c0_44, %c0_45], %72 {strides = array<i32>} : memref<1x4x8x8xf32, #tpu.memory_space<vmem>>, vector<1x1x8x8xf32>,
    %73 = vector.extract_strided_slice %38 {offsets = [0, 24], sizes = [8, 8], strides = [1, 1]} : vector<8x32xf32> to vector<8x8xf32>
    %c0_46 = arith.constant 0 : index
    %c3_47 = arith.constant 3 : index
    %c0_48 = arith.constant 0 : index
    %c0_49 = arith.constant 0 : index
    %74 = vector.load %arg10[%c0_46, %c3_47, %c0_48, %c0_49] : memref<1x4x8x8xf32, #tpu.memory_space<vmem>>, vector<1x1x8x8xf32>
    %75 = vector.shape_cast %74 : vector<1x1x8x8xf32> to vector<8x8xf32>
    %76 = vector.shape_cast %73 : vector<8x8xf32> to vector<1x1x8x8xf32>
    tpu.vector_store %arg10[%c0_46, %c3_47, %c0_48, %c0_49], %76 {strides = array<i32>} : memref<1x4x8x8xf32, #tpu.memory_space<vmem>>, vector<1x1x8x8xf32>,
    return
  }
  func.func @transform_0(%arg0: i32, %arg1: i32) -> (i32, i32, i32) {
    %c0_i32 = arith.constant 0 : i32
    %c0_i32_0 = arith.constant 0 : i32
    return %arg0, %arg1, %c0_i32 : i32, i32, i32
  }
  func.func @transform_1(%arg0: i32, %arg1: i32) -> (i32, i32) {
    %c0_i32 = arith.constant 0 : i32
    %c0_i32_0 = arith.constant 0 : i32
    %c0_i32_1 = arith.constant 0 : i32
    return %c0_i32, %c0_i32_0 : i32, i32
  }
  func.func @transform_2(%arg0: i32, %arg1: i32) -> (i32, i32) {
    %c0_i32 = arith.constant 0 : i32
    %c0_i32_0 = arith.constant 0 : i32
    %c0_i32_1 = arith.constant 0 : i32
    return %c0_i32, %c0_i32_0 : i32, i32
  }
  func.func @transform_3(%arg0: i32, %arg1: i32) -> (i32, i32) {
    %c0_i32 = arith.constant 0 : i32
    %c0_i32_0 = arith.constant 0 : i32
    %c0_i32_1 = arith.constant 0 : i32
    return %c0_i32, %c0_i32_0 : i32, i32
  }
  func.func @transform_4(%arg0: i32, %arg1: i32) -> (i32, i32) {
    %c0_i32 = arith.constant 0 : i32
    %c0_i32_0 = arith.constant 0 : i32
    %c0_i32_1 = arith.constant 0 : i32
    return %c0_i32, %c0_i32_0 : i32, i32
  }
  func.func @transform_5(%arg0: i32, %arg1: i32) -> (i32, i32, i32) {
    %c0_i32 = arith.constant 0 : i32
    %c0_i32_0 = arith.constant 0 : i32
    return %arg0, %arg1, %c0_i32 : i32, i32, i32
  }
  func.func @transform_6(%arg0: i32, %arg1: i32) -> (i32, i32, i32) {
    %c0_i32 = arith.constant 0 : i32
    %c0_i32_0 = arith.constant 0 : i32
    return %arg0, %arg1, %c0_i32 : i32, i32, i32
  }
  func.func @transform_7(%arg0: i32, %arg1: i32) -> (i32, i32, i32, i32) {
    %c0_i32 = arith.constant 0 : i32
    %c0_i32_0 = arith.constant 0 : i32
    %c0_i32_1 = arith.constant 0 : i32
    return %arg0, %c0_i32, %arg1, %c0_i32_0 : i32, i32, i32, i32
  }
  func.func @transform_8(%arg0: i32, %arg1: i32) -> (i32, i32, i32, i32) {
    %c0_i32 = arith.constant 0 : i32
    %c0_i32_0 = arith.constant 0 : i32
    %c0_i32_1 = arith.constant 0 : i32
    return %arg0, %c0_i32, %arg1, %c0_i32_0 : i32, i32, i32, i32
  }
}

</mosaic_0001>

<llo_original>
// kernel: tpu_custom_call.1
$region0: #{tpu_custom_call.1}
  #allocation0 [shape = 'u32[]', space=smem, size = 0x4, offset = 0x4, fixed_abs, tag = 'smem constant byte address 0x4 - core index']
  #allocation1 [shape = 'u32[144,128]{1,0:T(1,128)}', space=vmem, size = 0x12000, scoped, tag = 'internal scratch']
  %s0 = inlined_call_operand.hbm [shape: f32[2,8,32], index: 0, kind: input, shape index: {}]
  %s1 = inlined_call_operand.vmem [shape: f32[1,32], index: 1, kind: input, shape index: {}]
  %s2 = inlined_call_operand.vmem [shape: f32[1,32], index: 2, kind: input, shape index: {}]
  %s3 = inlined_call_operand.hbm [shape: f32[32,64], index: 3, kind: input, shape index: {}]
  %s4 = inlined_call_operand.vmem [shape: f32[1,64], index: 4, kind: input, shape index: {}]
  %s5 = inlined_call_operand.hbm [shape: f32[2,8,32], index: 5, kind: output, shape index: {0}]
  %s6 = inlined_call_operand.hbm [shape: f32[2,8,32], index: 6, kind: output, shape index: {1}]
  %s7 = inlined_call_operand.hbm [shape: f32[2,4,8,8], index: 7, kind: output, shape index: {2}]
  %s8 = inlined_call_operand.hbm [shape: f32[2,4,8,8], index: 8, kind: output, shape index: {3}]
  %9 = xla_tuple %s5, %s6, %s7, %s8
  %s10 = sld [smem:[#allocation0]]
  $region85: #{tpu_custom_call.1} parent=0
    _
  %s12 = ssub.s32 1, %s10
  %s13 = scalar_select 0, %s12, %s10
  $region1: #{tpu_custom_call.1} parent=0
    #allocation2 [shape = 'u8[8192]{0}', space=vmem, size = 0x2000, scoped, tag = 'input window, operand 0']
    #allocation3 [shape = 's32[2]{0}', space=sflag, size = 0x8, scoped, tag = 'scoped memory for tpu_custom_call.1']
    #allocation4 [shape = 's32[2]{0}', space=sflag, size = 0x8, scoped, tag = 'scoped memory for tpu_custom_call.1']
    #allocation5 [shape = 'u8[16384]{0}', space=vmem, size = 0x4000, scoped, tag = 'input window, operand 3, single buffered']
    #allocation6 [shape = 's32[1]{0}', space=sflag, size = 0x4, scoped, tag = 'scoped memory for tpu_custom_call.1']
    #allocation7 [shape = 'u8[8192]{0}', space=vmem, size = 0x2000, scoped, tag = 'output window, operand 0']
    #allocation8 [shape = 'u8[8192]{0}', space=vmem, size = 0x2000, scoped, tag = 'output window, operand 1']
    #allocation9 [shape = 's32[2]{0}', space=sflag, size = 0x8, scoped, tag = 'scoped memory for tpu_custom_call.1']
    #allocation10 [shape = 'u8[32768]{0}', space=vmem, size = 0x8000, scoped, tag = 'output window, operand 2']
    #allocation11 [shape = 'u8[32768]{0}', space=vmem, size = 0x8000, scoped, tag = 'output window, operand 3']
    #allocation12 [shape = 's32[2]{0}', space=sflag, size = 0x8, scoped, tag = 'scoped memory for tpu_custom_call.1']
    %14 = vsyncpa [#allocation3], 0
    %s15 = scalar_lea.sflag [#allocation3], 1
    %16 = vsyncpa %s15, 0
    %17 = vsyncpa [#allocation6], 0
    %18 = vsyncpa [#allocation4], 0
    %s19 = scalar_lea.sflag [#allocation4], 1
    %20 = vsyncpa %s19, 0
    %21 = vsyncpa [#allocation9], 0
    %s22 = scalar_lea.sflag [#allocation9], 1
    %23 = vsyncpa %s22, 0
    %24 = vsyncpa [#allocation12], 0
    %s25 = scalar_lea.sflag [#allocation12], 1
    %26 = vsyncpa %s25, 0
    loop: start=0, step=1, limit=4
    $region2: #{tpu_custom_call.1} parent=1 // loop_pre_header
      _
    $region3: #{tpu_custom_call.1} parent=1 // loop_header
      %s28 = sphi 0, %s32
      %p29 = scmp.ge.s32.totalorder %s28, 4
      %s35 = sphi 0, %s47
      %s36 = sphi 0, %s43
      %s37 = sphi 0, %s35
      %s38 = sphi 0, %s36
      %s39 = sphi 0, %s37
      %s40 = sphi 0, %s38
      %s52 = sphi 0, %s54
      %s55 = sphi 0, %s52
      %s56 = sphi 0, %s55
      %s72 = sphi 0, %s56
      %s76 = sphi 0, %s76
      %s78 = sphi 0, %s76
      %s79 = sphi 0, %s78
      %s93 = sphi 0, %s79
      %s97 = sphi 0, %s97
      %s99 = sphi 0, %s97
      %s100 = sphi 0, %s99
      %s114 = sphi 0, %s100
      %s118 = sphi 0, %s118
      %s120 = sphi 0, %s118
      %s121 = sphi 0, %s120
      %s135 = sphi 0, %s121
      %s139 = sphi 0, %s139
      %s141 = sphi 0, %s139
      %s142 = sphi 0, %s141
      %s156 = sphi 0, %s142
      %s164 = sphi 0, %s166
      %s167 = sphi 0, %s164
      %s168 = sphi 0, %s167
      %s184 = sphi 0, %s168
      %s192 = sphi 0, %s194
      %s195 = sphi 0, %s192
      %s196 = sphi 0, %s195
      %s212 = sphi 0, %s196
      %s220 = sphi 0, %s222
      %s223 = sphi 0, %s220
      %s224 = sphi 0, %s223
      %s240 = sphi 0, %s224
      %s248 = sphi 0, %s250
      %s251 = sphi 0, %s248
      %s252 = sphi 0, %s251
      %s268 = sphi 0, %s252
    $region4: #{tpu_custom_call.1} parent=1 // loop_header_branch
      %31 = sbr.rel (%p29) target = $region8
    $region5: #{tpu_custom_call.1} parent=1 // loop_body
      %s33 = ssub.s32 %s28, 1
      %s34 = ssub.s32 %s28, 2
      %s41 = sadd.s32 1, %s36
      %p42 = scmp.ge.s32.totalorder %s41, 1
      %s43 = scalar_select %p42, 0, %s41
      %s44 = sadd.s32 1, %s35
      %s45 = scalar_select %p42, %s44, %s35
      %p46 = scmp.ge.s32.totalorder %s45, 2
      %s47 = scalar_select %p46, 0, %s45
      %s48 = ssub.s32 %s35, %s47
      %s49 = ssub.s32 %s36, %s43
      %s50 = sor.u32 %s48, %s49
      %p51 = scmp.eq.s32.totalorder %s50, 0
      %s53 = sadd.s32 %s52, 1
      %s54 = scalar_select %p51, %s52, %s53
      %p57 = pneg %p51
      %p58 = scmp.eq.s32.totalorder %s28, 1
      %p59 = por %p57, %p58
      %p60 = scmp.ne.s32.totalorder %s52, %s55
      %p61 = scmp.eq.s32.totalorder %s28, 0
      %p62 = por %p60, %p61
      %p63 = scmp.ne.s32.totalorder %s52, %s55
      %p64 = scmp.eq.s32.totalorder %s33, 1
      %p65 = por %p63, %p64
      %p66 = scmp.ne.s32.totalorder %s55, %s56
      %p67 = scmp.eq.s32.totalorder %s33, 0
      %p68 = por %p66, %p67
      %p69 = scmp.ne.s32.totalorder %s55, %s56
      %p70 = scmp.eq.s32.totalorder %s34, 1
      %p71 = por %p69, %p70
      %p73 = scmp.ne.s32.totalorder %s56, %s72
      %p74 = scmp.eq.s32.totalorder %s34, 0
      %p75 = por %p73, %p74
      %s77 = sadd.s32 %s76, 1
      %p80 = scmp.eq.s32.totalorder %s28, 1
      %p81 = scmp.ne.s32.totalorder %s76, %s78
      %p82 = scmp.eq.s32.totalorder %s28, 0
      %p83 = por %p81, %p82
      %p84 = scmp.ne.s32.totalorder %s76, %s78
      %p85 = scmp.eq.s32.totalorder %s33, 1
      %p86 = por %p84, %p85
      %p87 = scmp.ne.s32.totalorder %s78, %s79
      %p88 = scmp.eq.s32.totalorder %s33, 0
      %p89 = por %p87, %p88
      %p90 = scmp.ne.s32.totalorder %s78, %s79
      %p91 = scmp.eq.s32.totalorder %s34, 1
      %p92 = por %p90, %p91
      %p94 = scmp.ne.s32.totalorder %s79, %s93
      %p95 = scmp.eq.s32.totalorder %s34, 0
      %p96 = por %p94, %p95
      %s98 = sadd.s32 %s97, 1
      %p101 = scmp.eq.s32.totalorder %s28, 1
      %p102 = scmp.ne.s32.totalorder %s97, %s99
      %p103 = scmp.eq.s32.totalorder %s28, 0
      %p104 = por %p102, %p103
      %p105 = scmp.ne.s32.totalorder %s97, %s99
      %p106 = scmp.eq.s32.totalorder %s33, 1
      %p107 = por %p105, %p106
      %p108 = scmp.ne.s32.totalorder %s99, %s100
      %p109 = scmp.eq.s32.totalorder %s33, 0
      %p110 = por %p108, %p109
      %p111 = scmp.ne.s32.totalorder %s99, %s100
      %p112 = scmp.eq.s32.totalorder %s34, 1
      %p113 = por %p111, %p112
      %p115 = scmp.ne.s32.totalorder %s100, %s114
      %p116 = scmp.eq.s32.totalorder %s34, 0
      %p117 = por %p115, %p116
      %s119 = sadd.s32 %s118, 1
      %p122 = scmp.eq.s32.totalorder %s28, 1
      %p123 = scmp.ne.s32.totalorder %s118, %s120
      %p124 = scmp.eq.s32.totalorder %s28, 0
      %p125 = por %p123, %p124
      %p126 = scmp.ne.s32.totalorder %s118, %s120
      %p127 = scmp.eq.s32.totalorder %s33, 1
      %p128 = por %p126, %p127
      %p129 = scmp.ne.s32.totalorder %s120, %s121
      %p130 = scmp.eq.s32.totalorder %s33, 0
      %p131 = por %p129, %p130
      %p132 = scmp.ne.s32.totalorder %s120, %s121
      %p133 = scmp.eq.s32.totalorder %s34, 1
      %p134 = por %p132, %p133
      %p136 = scmp.ne.s32.totalorder %s121, %s135
      %p137 = scmp.eq.s32.totalorder %s34, 0
      %p138 = por %p136, %p137
      %s140 = sadd.s32 %s139, 1
      %p143 = scmp.eq.s32.totalorder %s28, 1
      %p144 = scmp.ne.s32.totalorder %s139, %s141
      %p145 = scmp.eq.s32.totalorder %s28, 0
      %p146 = por %p144, %p145
      %p147 = scmp.ne.s32.totalorder %s139, %s141
      %p148 = scmp.eq.s32.totalorder %s33, 1
      %p149 = por %p147, %p148
      %p150 = scmp.ne.s32.totalorder %s141, %s142
      %p151 = scmp.eq.s32.totalorder %s33, 0
      %p152 = por %p150, %p151
      %p153 = scmp.ne.s32.totalorder %s141, %s142
      %p154 = scmp.eq.s32.totalorder %s34, 1
      %p155 = por %p153, %p154
      %p157 = scmp.ne.s32.totalorder %s142, %s156
      %p158 = scmp.eq.s32.totalorder %s34, 0
      %p159 = por %p157, %p158
      %s160 = ssub.s32 %s35, %s47
      %s161 = ssub.s32 %s36, %s43
      %s162 = sor.u32 %s160, %s161
      %p163 = scmp.eq.s32.totalorder %s162, 0
      %s165 = sadd.s32 %s164, 1
      %s166 = scalar_select %p163, %s164, %s165
      %p169 = pneg %p163
      %p170 = scmp.eq.s32.totalorder %s28, 1
      %p171 = por %p169, %p170
      %p172 = scmp.ne.s32.totalorder %s164, %s167
      %p173 = scmp.eq.s32.totalorder %s28, 0
      %p174 = por %p172, %p173
      %p175 = scmp.ne.s32.totalorder %s164, %s167
      %p176 = scmp.eq.s32.totalorder %s33, 1
      %p177 = por %p175, %p176
      %p178 = scmp.ne.s32.totalorder %s167, %s168
      %p179 = scmp.eq.s32.totalorder %s33, 0
      %p180 = por %p178, %p179
      %p181 = scmp.ne.s32.totalorder %s167, %s168
      %p182 = scmp.eq.s32.totalorder %s34, 1
      %p183 = por %p181, %p182
      %p185 = scmp.ne.s32.totalorder %s168, %s184
      %p186 = scmp.eq.s32.totalorder %s34, 0
      %p187 = por %p185, %p186
      %s188 = ssub.s32 %s35, %s47
      %s189 = ssub.s32 %s36, %s43
      %s190 = sor.u32 %s188, %s189
      %p191 = scmp.eq.s32.totalorder %s190, 0
      %s193 = sadd.s32 %s192, 1
      %s194 = scalar_select %p191, %s192, %s193
      %p197 = pneg %p191
      %p198 = scmp.eq.s32.totalorder %s28, 1
      %p199 = por %p197, %p198
      %p200 = scmp.ne.s32.totalorder %s192, %s195
      %p201 = scmp.eq.s32.totalorder %s28, 0
      %p202 = por %p200, %p201
      %p203 = scmp.ne.s32.totalorder %s192, %s195
      %p204 = scmp.eq.s32.totalorder %s33, 1
      %p205 = por %p203, %p204
      %p206 = scmp.ne.s32.totalorder %s195, %s196
      %p207 = scmp.eq.s32.totalorder %s33, 0
      %p208 = por %p206, %p207
      %p209 = scmp.ne.s32.totalorder %s195, %s196
      %p210 = scmp.eq.s32.totalorder %s34, 1
      %p211 = por %p209, %p210
      %p213 = scmp.ne.s32.totalorder %s196, %s212
      %p214 = scmp.eq.s32.totalorder %s34, 0
      %p215 = por %p213, %p214
      %s216 = ssub.s32 %s35, %s47
      %s217 = ssub.s32 %s36, %s43
      %s218 = sor.u32 %s216, %s217
      %p219 = scmp.eq.s32.totalorder %s218, 0
      %s221 = sadd.s32 %s220, 1
      %s222 = scalar_select %p219, %s220, %s221
      %p225 = pneg %p219
      %p226 = scmp.eq.s32.totalorder %s28, 1
      %p227 = por %p225, %p226
      %p228 = scmp.ne.s32.totalorder %s220, %s223
      %p229 = scmp.eq.s32.totalorder %s28, 0
      %p230 = por %p228, %p229
      %p231 = scmp.ne.s32.totalorder %s220, %s223
      %p232 = scmp.eq.s32.totalorder %s33, 1
      %p233 = por %p231, %p232
      %p234 = scmp.ne.s32.totalorder %s223, %s224
      %p235 = scmp.eq.s32.totalorder %s33, 0
      %p236 = por %p234, %p235
      %p237 = scmp.ne.s32.totalorder %s223, %s224
      %p238 = scmp.eq.s32.totalorder %s34, 1
      %p239 = por %p237, %p238
      %p241 = scmp.ne.s32.totalorder %s224, %s240
      %p242 = scmp.eq.s32.totalorder %s34, 0
      %p243 = por %p241, %p242
      %s244 = ssub.s32 %s35, %s47
      %s245 = ssub.s32 %s36, %s43
      %s246 = sor.u32 %s244, %s245
      %p247 = scmp.eq.s32.totalorder %s246, 0
      %s249 = sadd.s32 %s248, 1
      %s250 = scalar_select %p247, %s248, %s249
      %p253 = pneg %p247
      %p254 = scmp.eq.s32.totalorder %s28, 1
      %p255 = por %p253, %p254
      %p256 = scmp.ne.s32.totalorder %s248, %s251
      %p257 = scmp.eq.s32.totalorder %s28, 0
      %p258 = por %p256, %p257
      %p259 = scmp.ne.s32.totalorder %s248, %s251
      %p260 = scmp.eq.s32.totalorder %s33, 1
      %p261 = por %p259, %p260
      %p262 = scmp.ne.s32.totalorder %s251, %s252
      %p263 = scmp.eq.s32.totalorder %s33, 0
      %p264 = por %p262, %p263
      %p265 = scmp.ne.s32.totalorder %s251, %s252
      %p266 = scmp.eq.s32.totalorder %s34, 1
      %p267 = por %p265, %p266
      %p269 = scmp.ne.s32.totalorder %s252, %s268
      %p270 = scmp.eq.s32.totalorder %s34, 0
      %p271 = por %p269, %p270
      %p272 = scmp.le.s32.totalorder 1, %s28
      %p273 = scmp.lt.s32.totalorder %s28, 3
      %p274 = pnand %p272, %p273
      %p275 = pneg %p274
      // Predicated region
      $region9: #{tpu_custom_call.1} parent=5 // pred_check
        _
      $region10: #{tpu_custom_call.1} parent=5 // pred_check_branch
        %277 = sbr.rel (%p274) target = $region12
      $region11: #{tpu_custom_call.1} parent=5 // pred_region
        %s278 = ssub.s32 %s28, 1
        // Predicated region
        $region13: #{tpu_custom_call.1} parent=11 // pred_check
          %p279 = pneg %p89
        $region14: #{tpu_custom_call.1} parent=11 // pred_check_branch
          %281 = sbr.rel (%p279) target = $region16
        $region15: #{tpu_custom_call.1} parent=11 // pred_region
          _
        $region16: #{tpu_custom_call.1} parent=11 // pred_fallthru
          _
        // Predicated region
        $region17: #{tpu_custom_call.1} parent=11 // pred_check
          %p282 = pneg %p110
        $region18: #{tpu_custom_call.1} parent=11 // pred_check_branch
          %284 = sbr.rel (%p282) target = $region20
        $region19: #{tpu_custom_call.1} parent=11 // pred_region
          _
        $region20: #{tpu_custom_call.1} parent=11 // pred_fallthru
          _
        // Predicated region
        $region21: #{tpu_custom_call.1} parent=11 // pred_check
          %p285 = pneg %p131
        $region22: #{tpu_custom_call.1} parent=11 // pred_check_branch
          %287 = sbr.rel (%p285) target = $region24
        $region23: #{tpu_custom_call.1} parent=11 // pred_region
          %s289 = ssub.s32 512, 512
          %290 = vsyncadd [#allocation6], %s289
          %s291 = sshll.u32 [#allocation5], 4
          %s292 = int_to_ptr.vmem [resolvable:$true] %s291
          %297 = dma.hbm_to_vmem [thread:$0]  %s3, 512, %s292, [#allocation6], 128, 128, 8
        $region24: #{tpu_custom_call.1} parent=11 // pred_fallthru
          _
        // Predicated region
        $region25: #{tpu_custom_call.1} parent=11 // pred_check
          %p298 = pneg %p152
        $region26: #{tpu_custom_call.1} parent=11 // pred_check_branch
          %300 = sbr.rel (%p298) target = $region28
        $region27: #{tpu_custom_call.1} parent=11 // pred_region
          _
        $region28: #{tpu_custom_call.1} parent=11 // pred_fallthru
          _
      $region12: #{tpu_custom_call.1} parent=5 // pred_fallthru
        _
      %p301 = scmp.lt.s32.totalorder %s28, 2
      // Predicated region
      $region29: #{tpu_custom_call.1} parent=5 // pred_check
        %p302 = pneg %p301
      $region30: #{tpu_custom_call.1} parent=5 // pred_check_branch
        %304 = sbr.rel (%p302) target = $region32
      $region31: #{tpu_custom_call.1} parent=5 // pred_region
        // Predicated region
        $region33: #{tpu_custom_call.1} parent=31 // pred_check
          %p305 = pneg %p62
        $region34: #{tpu_custom_call.1} parent=31 // pred_check_branch
          %307 = sbr.rel (%p305) target = $region36
        $region35: #{tpu_custom_call.1} parent=31 // pred_region
          %s308 = sand.u32 %s52, 1
          %s309 = scalar_lea.sflag [#allocation3], %s308
          %s310 = sand.u32 %s52, 1
          %s311 = smul.addr %s310, 8
          %s312 = scalar_lea.vmem [#allocation2], %s311
          %s314 = ssub.s32 128, 128
          %315 = vsyncadd %s309, %s314
          %s316 = sadd.s32 %s36, %s35
          %s317 = smul.addr %s316, 128
          %s318 = scalar_lea.hbm %s0, %s317
          %s320 = sshll.u32 %s312, 4
          %s321 = int_to_ptr.vmem [resolvable:$true] %s320
          %323 = dma.hbm_to_vmem [thread:$0]  %s318, 128, %s321, %s309
        $region36: #{tpu_custom_call.1} parent=31 // pred_fallthru
          _
      $region32: #{tpu_custom_call.1} parent=5 // pred_fallthru
        _
      %p324 = scmp.le.s32.totalorder 1, %s28
      %p325 = scmp.lt.s32.totalorder %s28, 3
      %p326 = pnand %p324, %p325
      %p327 = pneg %p326
      // Predicated region
      $region37: #{tpu_custom_call.1} parent=5 // pred_check
        _
      $region38: #{tpu_custom_call.1} parent=5 // pred_check_branch
        %329 = sbr.rel (%p326) target = $region40
      $region39: #{tpu_custom_call.1} parent=5 // pred_region
        %s330 = ssub.s32 %s28, 1
        %s331 = sand.u32 %s55, 1
        %s332 = scalar_lea.sflag [#allocation3], %s331
        %s333 = sand.u32 %s55, 1
        %s334 = smul.addr %s333, 8
        %s335 = scalar_lea.vmem [#allocation2], %s334
        // Predicated region
        $region41: #{tpu_custom_call.1} parent=39 // pred_check
          %p336 = pneg %p68
        $region42: #{tpu_custom_call.1} parent=39 // pred_check_branch
          %338 = sbr.rel (%p336) target = $region44
        $region43: #{tpu_custom_call.1} parent=39 // pred_region
          %339 = dma.done %s332, 128
        $region44: #{tpu_custom_call.1} parent=39 // pred_fallthru
          _
        // Predicated region
        $region45: #{tpu_custom_call.1} parent=39 // pred_check
          %p340 = pneg %p131
        $region46: #{tpu_custom_call.1} parent=39 // pred_check_branch
          %342 = sbr.rel (%p340) target = $region48
        $region47: #{tpu_custom_call.1} parent=39 // pred_region
          %343 = dma.done [#allocation6], 512
        $region48: #{tpu_custom_call.1} parent=39 // pred_fallthru
          _
        %s344 = sand.u32 %s55, 1
        %s345 = scalar_lea.sflag [#allocation3], %s344
        %s346 = sand.u32 %s55, 1
        %s347 = smul.addr %s346, 8
        %s348 = scalar_lea.vmem [#allocation2], %s347
        %p349 = pneg %p68
        %p350 = pneg %p65
        %p351 = pneg %p89
        %p352 = pneg %p86
        %p353 = pneg %p110
        %p354 = pneg %p107
        %p355 = pneg %p131
        %p356 = pneg %p128
        %p357 = pneg %p152
        %p358 = pneg %p149
        %p359 = pneg %p180
        %p360 = pneg %p177
        %s361 = sand.u32 %s167, 1
        %s362 = scalar_lea.sflag [#allocation4], %s361
        %s363 = sand.u32 %s167, 1
        %s364 = smul.addr %s363, 8
        %s365 = scalar_lea.vmem [#allocation7], %s364
        %p366 = pneg %p208
        %p367 = pneg %p205
        %s368 = sand.u32 %s33, 1
        %s369 = scalar_lea.sflag [#allocation9], %s368
        %s370 = sand.u32 %s195, 1
        %s371 = smul.addr %s370, 8
        %s372 = scalar_lea.vmem [#allocation8], %s371
        %p373 = pneg %p236
        %p374 = pneg %p233
        %s375 = sand.u32 %s33, 1
        %s376 = scalar_lea.sflag [#allocation9], %s375
        %s377 = sand.u32 %s223, 1
        %s378 = smul.addr %s377, 32
        %s379 = scalar_lea.vmem [#allocation10], %s378
        %p380 = pneg %p264
        %p381 = pneg %p261
        %s382 = sand.u32 %s251, 1
        %s383 = scalar_lea.sflag [#allocation12], %s382
        %s384 = sand.u32 %s251, 1
        %s385 = smul.addr %s384, 32
        %s386 = scalar_lea.vmem [#allocation11], %s385
        %v387 = vld [vmem:[%s335] sm:$0xff]
        %v388 = vld [vmem:[%s1] sm:$0x1]
        %v389 = vld [vmem:[%s2] sm:$0x1]
        %vm390 = vcmask 261120
        %v391 = vsel %vm390, %v387, 0.0
        %392 = vadd.xlane.f32.xlu0 %v391
        %v393 = vpop.xlane.xlu0 %392
        %v394 = vrcp.pop 32.0
        %v395 = vmul.f32 %v393, %v394
        %v396 = vsub.f32 %v387, %v395
        %v397 = vmul.f32 %v396, %v396
        %v398 = vsel %vm390, %v397, 0.0
        %399 = vadd.xlane.f32.xlu0 %v398
        %v400 = vpop.xlane.xlu0 %399
        %v401 = vmul.f32 %v400, %v394
        %v402 = vadd.f32 %v401, 1e-05
        %v403 = vrsqrt.pop %v402
        %v404 = vmul.f32 %v396, %v403
        %v406 = vlaneseq
        %v407 = vshrl.u32 %v406, 7
        %v408 = vsub.s32 0, %v407
        %v409 = vrot.slane %v388, %v408
        %v411 = vmul.f32 %v404, %v409
        %v413 = vlaneseq
        %v414 = vshrl.u32 %v413, 7
        %v415 = vsub.s32 0, %v414
        %v416 = vrot.slane %v389, %v415
        %v418 = vadd.f32 %v411, %v416
        %v419 = vld [vmem:[#allocation5] sm:$0xff]
        %v420 = vld [vmem:[#allocation5 + $0x8] sm:$0xff]
        %v421 = vld [vmem:[#allocation5 + $0x10] sm:$0xff]
        %v422 = vld [vmem:[#allocation5 + $0x18] sm:$0xff]
        %v423 = vld [vmem:[%s4] sm:$0x1]
        %v425 = vlaneseq
        %v426 = vshrl.u32 %v425, 7
        %v427 = vsub.s32 0, %v426
        %v428 = vrot.slane %v423, %v427
        %v431 = vsel %vm390, %v418, 0
        %433 = vmatprep.subr.mxu0 0.0
        %434 = vmatpush1.msra.mxu0 %v419
        %435 = vmatprep.subr.mxu0 0.0
        %436 = vmatpush1.msra.mxu0 %v420
        %437 = vmatprep.subr.mxu0 0.0
        %438 = vmatpush1.msra.mxu0 %v421
        %439 = vmatprep.subr.mxu0 0.0
        %440 = vmatpush1.msra.mxu0 %v422
        %441 = vmatprep.subr.mxu0 0.0
        %442 = vmatpush1.msra.mxu0 0.0
        %443 = vmatprep.subr.mxu0 0.0
        %444 = vmatpush1.msra.mxu0 0.0
        %445 = vmatprep.subr.mxu0 0.0
        %446 = vmatpush1.msra.mxu0 0.0
        %447 = vmatprep.subr.mxu0 0.0
        %448 = vmatpush1.msra.mxu0 0.0
        %449 = vmatprep.subr.mxu0 0.0
        %450 = vmatpush1.msra.mxu0 0.0
        %451 = vmatprep.subr.mxu0 0.0
        %452 = vmatpush1.msra.mxu0 0.0
        %453 = vmatprep.subr.mxu0 0.0
        %454 = vmatpush1.msra.mxu0 0.0
        %455 = vmatprep.subr.mxu0 0.0
        %456 = vmatpush1.msra.mxu0 0.0
        %457 = vmatprep.subr.mxu0 0.0
        %458 = vmatpush1.msra.mxu0 0.0
        %459 = vmatprep.subr.mxu0 0.0
        %460 = vmatpush1.msra.mxu0 0.0
        %461 = vmatprep.subr.mxu0 0.0
        %462 = vmatpush1.msra.mxu0 0.0
        %463 = vmatprep.subr.mxu0 0.0
        %464 = vmatpush1.msra.mxu0 0.0
        %465 = vmatprep.subr.mxu0 0.0
        %466 = vmatpush1.msra.mxu0 0.0
        %467 = vmatprep.subr.mxu0 0.0
        %468 = vmatpush1.msra.mxu0 0.0
        %469 = vmatprep.subr.mxu0 0.0
        %470 = vmatpush1.msra.mxu0 0.0
        %471 = vmatprep.subr.mxu0 0.0
        %472 = vmatpush1.msra.mxu0 0.0
        %473 = vmatprep.subr.mxu0 0.0
        %474 = vmatpush1.msra.mxu0 0.0
        %475 = vmatprep.subr.mxu0 0.0
        %476 = vmatpush1.msra.mxu0 0.0
        %477 = vmatprep.subr.mxu0 0.0
        %478 = vmatpush1.msra.mxu0 0.0
        %479 = vmatprep.subr.mxu0 0.0
        %480 = vmatpush1.msra.mxu0 0.0
        %481 = vmatprep.subr.mxu0 0.0
        %482 = vmatpush1.msra.mxu0 0.0
        %483 = vmatprep.subr.mxu0 0.0
        %484 = vmatpush1.msra.mxu0 0.0
        %485 = vmatprep.subr.mxu0 0.0
        %486 = vmatpush1.msra.mxu0 0.0
        %487 = vmatprep.subr.mxu0 0.0
        %488 = vmatpush1.msra.mxu0 0.0
        %489 = vmatprep.subr.mxu0 0.0
        %490 = vmatpush1.msra.mxu0 0.0
        %491 = vmatprep.subr.mxu0 0.0
        %492 = vmatpush1.msra.mxu0 0.0
        %493 = vmatprep.subr.mxu0 0.0
        %494 = vmatpush1.msra.mxu0 0.0
        %495 = vmatprep.subr.mxu0 0.0
        %496 = vmatpush1.msra.mxu0 0.0
        %497 = vmatprep.mubr.f32.mxu0 0.0
        %498 = vmatmul.mubr.f32.gmra.mrb[0].mxu0 %v431
        %v499 = vpop.f32.mrb[0].mxu0
        %v500 = vadd.f32 %v428, %v499
        %v501 = vpop.f32.mrb[0].mxu0
        %502 = vdwg.mxu0
        %503 = vst.msk [vmem:[%s365] sm:$0xff] %vm390, %v500
        %505 = vrot.lane.b32.xlu0 %v500, 96
        %v506 = vpop.permute.xlu0 %505
        %508 = vst.msk [vmem:[%s372] sm:$0xff] %vm390, %v506
        %vm509 = vcmask 64512
        %510 = vst.msk [vmem:[%s379] sm:$0xff] %vm509, %v500
        %511 = vst.msk [vmem:[%s386] sm:$0xff] %vm509, %v506
        %512 = vrot.lane.b32.xlu0 %v500, 120
        %v513 = vpop.permute.xlu0 %512
        %s515 = scalar_lea.vmem %s379, 8 [#allocation10]
        %516 = vst.msk [vmem:[%s515] sm:$0xff] %vm509, %v513
        %517 = vrot.lane.b32.xlu0 %v500, 88
        %v518 = vpop.permute.xlu0 %517
        %s520 = scalar_lea.vmem %s386, 8 [#allocation11]
        %521 = vst.msk [vmem:[%s520] sm:$0xff] %vm509, %v518
        %522 = vrot.lane.b32.xlu0 %v500, 112
        %v523 = vpop.permute.xlu0 %522
        %s525 = scalar_lea.vmem %s379, 16 [#allocation10]
        %526 = vst.msk [vmem:[%s525] sm:$0xff] %vm509, %v523
        %527 = vrot.lane.b32.xlu0 %v500, 80
        %v528 = vpop.permute.xlu0 %527
        %s530 = scalar_lea.vmem %s386, 16 [#allocation11]
        %531 = vst.msk [vmem:[%s530] sm:$0xff] %vm509, %v528
        %532 = vrot.lane.b32.xlu0 %v500, 104
        %v533 = vpop.permute.xlu0 %532
        %s535 = scalar_lea.vmem %s379, 24 [#allocation10]
        %536 = vst.msk [vmem:[%s535] sm:$0xff] %vm509, %v533
        %537 = vrot.lane.b32.xlu0 %v500, 72
        %v538 = vpop.permute.xlu0 %537
        %s540 = scalar_lea.vmem %s386, 24 [#allocation11]
        %541 = vst.msk [vmem:[%s540] sm:$0xff] %vm509, %v538
        %s542 = sand.u32 %s167, 1
        %s543 = scalar_lea.sflag [#allocation4], %s542
        %s544 = sand.u32 %s167, 1
        %s545 = smul.addr %s544, 8
        %s546 = scalar_lea.vmem [#allocation7], %s545
        %s547 = sand.u32 %s33, 1
        %s548 = scalar_lea.sflag [#allocation9], %s547
        %s549 = sand.u32 %s195, 1
        %s550 = smul.addr %s549, 8
        %s551 = scalar_lea.vmem [#allocation8], %s550
        %s552 = sand.u32 %s33, 1
        %s553 = scalar_lea.sflag [#allocation9], %s552
        %s554 = sand.u32 %s223, 1
        %s555 = smul.addr %s554, 32
        %s556 = scalar_lea.vmem [#allocation10], %s555
        %s557 = sand.u32 %s251, 1
        %s558 = scalar_lea.sflag [#allocation12], %s557
        %s559 = sand.u32 %s251, 1
        %s560 = smul.addr %s559, 32
        %s561 = scalar_lea.vmem [#allocation11], %s560
        // Predicated region
        $region49: #{tpu_custom_call.1} parent=39 // pred_check
          %p562 = pneg %p177
        $region50: #{tpu_custom_call.1} parent=39 // pred_check_branch
          %564 = sbr.rel (%p562) target = $region52
        $region51: #{tpu_custom_call.1} parent=39 // pred_region
          %s566 = ssub.s32 128, 128
          %567 = vsyncadd %s543, %s566
          %s568 = sadd.s32 %s38, %s37
          %s569 = smul.addr %s568, 128
          %s570 = scalar_lea.hbm %s5, %s569
          %s572 = sshll.u32 %s546, 4
          %s573 = int_to_ptr.vmem [resolvable:$true] %s572
          %575 = dma.vmem_to_hbm [thread:$0]  %s573, 128, %s570, %s543
        $region52: #{tpu_custom_call.1} parent=39 // pred_fallthru
          _
        // Predicated region
        $region53: #{tpu_custom_call.1} parent=39 // pred_check
          %p576 = pneg %p205
        $region54: #{tpu_custom_call.1} parent=39 // pred_check_branch
          %578 = sbr.rel (%p576) target = $region56
        $region55: #{tpu_custom_call.1} parent=39 // pred_region
          %s580 = ssub.s32 128, 128
          %581 = vsyncadd %s548, %s580
          %s582 = sadd.s32 %s38, %s37
          %s583 = smul.addr %s582, 128
          %s584 = scalar_lea.hbm %s6, %s583
          %s586 = sshll.u32 %s551, 4
          %s587 = int_to_ptr.vmem [resolvable:$true] %s586
          %589 = dma.vmem_to_hbm [thread:$0]  %s587, 128, %s584, %s548
        $region56: #{tpu_custom_call.1} parent=39 // pred_fallthru
          _
        // Predicated region
        $region57: #{tpu_custom_call.1} parent=39 // pred_check
          %p590 = pneg %p233
        $region58: #{tpu_custom_call.1} parent=39 // pred_check_branch
          %592 = sbr.rel (%p590) target = $region60
        $region59: #{tpu_custom_call.1} parent=39 // pred_region
          %s594 = ssub.s32 512, 512
          %595 = vsyncadd %s553, %s594
          %s596 = smul.addr %s37, 4
          %s597 = sadd.s32 %s38, %s596
          %s598 = smul.addr %s597, 128
          %s599 = scalar_lea.hbm %s7, %s598
          %s600 = sshll.u32 %s556, 4
          %s601 = int_to_ptr.vmem [resolvable:$true] %s600
          %606 = dma.vmem_to_hbm [thread:$0]  %s601, 512, %s599, %s553, 128, 128, 8
        $region60: #{tpu_custom_call.1} parent=39 // pred_fallthru
          _
        // Predicated region
        $region61: #{tpu_custom_call.1} parent=39 // pred_check
          %p607 = pneg %p261
        $region62: #{tpu_custom_call.1} parent=39 // pred_check_branch
          %609 = sbr.rel (%p607) target = $region64
        $region63: #{tpu_custom_call.1} parent=39 // pred_region
          %s611 = ssub.s32 512, 512
          %612 = vsyncadd %s558, %s611
          %s613 = smul.addr %s37, 4
          %s614 = sadd.s32 %s38, %s613
          %s615 = smul.addr %s614, 128
          %s616 = scalar_lea.hbm %s8, %s615
          %s617 = sshll.u32 %s561, 4
          %s618 = int_to_ptr.vmem [resolvable:$true] %s617
          %623 = dma.vmem_to_hbm [thread:$0]  %s618, 512, %s616, %s558, 128, 128, 8
        $region64: #{tpu_custom_call.1} parent=39 // pred_fallthru
          _
      $region40: #{tpu_custom_call.1} parent=5 // pred_fallthru
        _
      %p624 = scmp.le.s32.totalorder 2, %s28
      // Predicated region
      $region65: #{tpu_custom_call.1} parent=5 // pred_check
        %p625 = pneg %p624
      $region66: #{tpu_custom_call.1} parent=5 // pred_check_branch
        %627 = sbr.rel (%p625) target = $region68
      $region67: #{tpu_custom_call.1} parent=5 // pred_region
        %s628 = ssub.s32 %s28, 2
        // Predicated region
        $region69: #{tpu_custom_call.1} parent=67 // pred_check
          %p629 = pneg %p183
        $region70: #{tpu_custom_call.1} parent=67 // pred_check_branch
          %631 = sbr.rel (%p629) target = $region72
        $region71: #{tpu_custom_call.1} parent=67 // pred_region
          %s632 = sand.u32 %s168, 1
          %s633 = scalar_lea.sflag [#allocation4], %s632
          %s634 = sand.u32 %s168, 1
          %s635 = smul.addr %s634, 8
          %s636 = scalar_lea.vmem [#allocation7], %s635
          %637 = dma.done %s633, 128
        $region72: #{tpu_custom_call.1} parent=67 // pred_fallthru
          _
        // Predicated region
        $region73: #{tpu_custom_call.1} parent=67 // pred_check
          %p638 = pneg %p211
        $region74: #{tpu_custom_call.1} parent=67 // pred_check_branch
          %640 = sbr.rel (%p638) target = $region76
        $region75: #{tpu_custom_call.1} parent=67 // pred_region
          %s641 = sand.u32 %s34, 1
          %s642 = scalar_lea.sflag [#allocation9], %s641
          %s643 = sand.u32 %s196, 1
          %s644 = smul.addr %s643, 8
          %s645 = scalar_lea.vmem [#allocation8], %s644
          %646 = dma.done %s642, 128
        $region76: #{tpu_custom_call.1} parent=67 // pred_fallthru
          _
        // Predicated region
        $region77: #{tpu_custom_call.1} parent=67 // pred_check
          %p647 = pneg %p239
        $region78: #{tpu_custom_call.1} parent=67 // pred_check_branch
          %649 = sbr.rel (%p647) target = $region80
        $region79: #{tpu_custom_call.1} parent=67 // pred_region
          %s650 = sand.u32 %s34, 1
          %s651 = scalar_lea.sflag [#allocation9], %s650
          %s652 = sand.u32 %s224, 1
          %s653 = smul.addr %s652, 32
          %s654 = scalar_lea.vmem [#allocation10], %s653
          %655 = dma.done %s651, 512
        $region80: #{tpu_custom_call.1} parent=67 // pred_fallthru
          _
        // Predicated region
        $region81: #{tpu_custom_call.1} parent=67 // pred_check
          %p656 = pneg %p267
        $region82: #{tpu_custom_call.1} parent=67 // pred_check_branch
          %658 = sbr.rel (%p656) target = $region84
        $region83: #{tpu_custom_call.1} parent=67 // pred_region
          %s659 = sand.u32 %s252, 1
          %s660 = scalar_lea.sflag [#allocation12], %s659
          %s661 = sand.u32 %s252, 1
          %s662 = smul.addr %s661, 32
          %s663 = scalar_lea.vmem [#allocation11], %s662
          %664 = dma.done %s660, 512
        $region84: #{tpu_custom_call.1} parent=67 // pred_fallthru
          _
      $region68: #{tpu_custom_call.1} parent=5 // pred_fallthru
        _
    $region6: #{tpu_custom_call.1} parent=1 // loop_footer
      %s32 = sadd.s32 1, %s28
    $region7: #{tpu_custom_call.1} parent=1 // loop_footer_branch
      %27 = sbr.rel target = $region3
    $region8: #{tpu_custom_call.1} parent=1 // loop_exit
      _
    %665 = vsyncpa [#allocation3], 1
    %s666 = scalar_lea.sflag [#allocation3], 1
    %667 = vsyncpa %s666, 1
    %668 = vsyncpa [#allocation6], 1
    %669 = vsyncpa [#allocation4], 1
    %s670 = scalar_lea.sflag [#allocation4], 1
    %671 = vsyncpa %s670, 1
    %672 = vsyncpa [#allocation9], 1
    %s673 = scalar_lea.sflag [#allocation9], 1
    %674 = vsyncpa %s673, 1
    %675 = vsyncpa [#allocation12], 1
    %s676 = scalar_lea.sflag [#allocation12], 1
    %677 = vsyncpa %s676, 1

</llo_original>
